<compile_context>
chip_gen: v6e
topology: v6e:2x2x1
jax: 0.10.0
libtpu: 0.0.40
codegen_flags: <defaults>
</compile_context>

<pallas_src>
import jax
import jax.numpy as jnp
from jax.experimental import pallas as pl
from jax.experimental.pallas import tpu as pltpu


def _round_up(x, m):
    return ((x + m - 1) // m) * m


def gate_kernel(emb_ref, w_ref, b_ref, out_ref):
    # emb_ref: (TB, dim) native dtype; w_ref: (dim, 3) same dtype; b_ref: (1, 3)
    # f32; out_ref: (TB, 3) f32.  HIGHEST precision keeps the f32 matmul exact;
    # the extra MXU passes are free slack under the emb DMA (N = 3).
    logits = jnp.dot(
        emb_ref[...], w_ref[...],
        preferred_element_type=jnp.float32,
        precision=jax.lax.Precision.HIGHEST,
    ) + b_ref[...]

    # Softmax over the 3 columns.  Explicit per-column max/sum keeps the work on
    # full-width VPU ops (no cross-lane reduce over a 3-of-128-lane vreg); the
    # exact divide keeps rows summing to 1 at f32 accuracy and is hidden under
    # the emb DMA anyway.
    l0 = logits[:, 0:1]
    l1 = logits[:, 1:2]
    l2 = logits[:, 2:3]
    m = jnp.maximum(jnp.maximum(l0, l1), l2)
    e = jnp.exp(logits - m)
    denom = e[:, 0:1] + e[:, 1:2] + e[:, 2:3]
    out_ref[...] = (e / denom).astype(out_ref.dtype)


def _vmem_capacity_bytes():
    """Physical VMEM per TensorCore; falls back to the smallest (v7x, 64 MiB)."""
    try:
        cap = int(getattr(pltpu.get_tpu_info(), "vmem_capacity_bytes", 0))
        if cap > 0:
            return cap
    except Exception:
        pass
    return 64 * 1024 * 1024


def _max_rows_for_vmem(dim, itemsize, row_align, vmem_capacity):
    """Largest row tile whose double-buffered emb stream fits ~30% of VMEM."""
    dim_lanes = _round_up(dim, 128)           # lane-padded VMEM footprint per row
    emb_budget = int(0.30 * vmem_capacity)    # leaves room for weight/out/scratch
    fit = emb_budget // (2 * dim_lanes * itemsize)
    return max(row_align, (fit // row_align) * row_align)


def _gate_call(emb, weight_t, bias2d, *, tile_b, vmem_limit, out_dtype,
               single_buffer_resident):
    B, dim = emb.shape
    grid = pl.cdiv(B, tile_b)
    # Constant-index weight/bias are resident; single-buffering them saves a
    # second lane-padded (dim, 128) copy in VMEM (matters most on v7x's 64 MiB).
    resident = dict(pipeline_mode=pl.Buffered(1)) if single_buffer_resident else {}
    return pl.pallas_call(
        gate_kernel,
        out_shape=jax.ShapeDtypeStruct((B, 3), out_dtype),
        grid=(grid,),
        in_specs=[
            pl.BlockSpec((tile_b, dim), lambda i: (i, 0)),          # streamed emb
            pl.BlockSpec((dim, 3), lambda i: (0, 0), **resident),   # resident W
            pl.BlockSpec((1, 3), lambda i: (0, 0), **resident),     # resident b
        ],
        out_specs=pl.BlockSpec((tile_b, 3), lambda i: (i, 0)),
        compiler_params=pltpu.CompilerParams(
            dimension_semantics=("parallel",),   # rows independent -> both v7x TCs
            vmem_limit_bytes=vmem_limit,
        ),
    )(emb, weight_t, bias2d)


_SINGLE_BUFFER_OK = None  # lazily probed: does this jax accept pl.Buffered(1)?


def gate_forward(emb, weight_t, bias, *, tile_b=None):
    """softmax(emb @ weight_t + bias, axis=-1).

    emb: [B, dim] (f32 or bf16), weight_t: [dim, 3], bias: [3] -> [B, 3] float32.
    Best HBM bandwidth when dim is a multiple of 128 (pad the feature dim once at
    model-setup time otherwise; a ragged last dim makes every row DMA partially
    masked on this bandwidth-bound kernel).
    """
    global _SINGLE_BUFFER_OK
    B, dim = emb.shape
    assert weight_t.shape == (dim, 3), weight_t.shape
    dtype = emb.dtype
    itemsize = jnp.dtype(dtype).itemsize
    row_align = max(8, 32 // itemsize)        # 8 rows f32, 16 bf16, 32 int8

    vmem_cap = _vmem_capacity_bytes()
    fit = _max_rows_for_vmem(dim, itemsize, row_align, vmem_cap)
    if tile_b is None:
        # >=4 grid steps on large batches (>=2 overlapped steps per v7x TC), with
        # a ~512-row floor so the ~0.35us/step overhead stays amortized.
        step_target = _round_up(-(-B // 4), row_align)
        tile = min(fit, 2048, max(512, step_target))
    else:
        # Clamp user-supplied tiles against the VMEM budget too.
        tile = min(_round_up(max(int(tile_b), 1), row_align), fit)
    # Small batches: a single full-array block (always layout-legal).  Otherwise
    # a row_align-multiple tile; Pallas handles the ragged last block itself —
    # no jnp.pad copy of emb through HBM.
    tile_b = B if tile >= B else tile

    weight_t = weight_t.astype(dtype)                     # native-dtype MXU feed
    bias2d = bias.astype(jnp.float32).reshape(1, 3)
    out_dtype = jnp.float32                               # [B,3] is tiny; keep f32

    # VMEM limit: emb double buffer + weight + bias + output (lane-padded), with
    # ~25% headroom, capped at ~60% of this generation's physical VMEM.
    dim_lanes = _round_up(dim, 128)
    est = 2 * tile_b * dim_lanes * itemsize               # emb stream
    est += 2 * _round_up(dim, 8) * 128 * itemsize         # weight (worst case 2 bufs)
    est += 2 * _round_up(tile_b, 8) * 128 * 4             # f32 output tiles
    est += 2 * 8 * 128 * 4                                # bias
    vmem_limit = int(1.25 * est) + (1 << 20)
    vmem_limit = max(16 * 1024 * 1024, min(vmem_limit, int(0.60 * vmem_cap)))

    kwargs = dict(tile_b=tile_b, vmem_limit=vmem_limit, out_dtype=out_dtype)
    if _SINGLE_BUFFER_OK is None:
        try:
            out = _gate_call(emb, weight_t, bias2d,
                             single_buffer_resident=True, **kwargs)
            _SINGLE_BUFFER_OK = True
            return out
        except Exception:
            _SINGLE_BUFFER_OK = False   # fall back to default double-buffering
    return _gate_call(emb, weight_t, bias2d,
                      single_buffer_resident=_SINGLE_BUFFER_OK, **kwargs)


def init_gate_params(key, dim):
    """Deterministic init matching PyTorch: xavier_uniform_ weight, default bias."""
    kw, kb = jax.random.split(key)
    # torch weight shape is (3, dim); xavier bound = sqrt(6 / (fan_in + fan_out))
    bound_w = (6.0 / (dim + 3)) ** 0.5
    weight = jax.random.uniform(kw, (3, dim), jnp.float32, -bound_w, bound_w)
    # torch.nn.Linear default bias init: U(-1/sqrt(fan_in), 1/sqrt(fan_in))
    bound_b = 1.0 / (dim ** 0.5)
    bias = jax.random.uniform(kb, (3,), jnp.float32, -bound_b, bound_b)
    # store transposed for the kernel's (B, dim) @ (dim, 3) matmul
    return weight.T, bias


if __name__ == "__main__":
    key = jax.random.PRNGKey(0)
    k_emb, k_params, k_emb2 = jax.random.split(key, 3)

    B, dim = 8, 32
    emb = jax.random.normal(k_emb, (B, dim), dtype=jnp.float32)
    weight_t, bias = init_gate_params(k_params, dim)

    def reference(e):
        logits = jnp.dot(e, weight_t, precision=jax.lax.Precision.HIGHEST) + bias
        return jax.nn.softmax(logits, axis=-1)

    out = jax.block_until_ready(gate_forward(emb, weight_t, bias))
    ref = reference(emb)
    assert out.shape == (B, 3)
    assert jnp.allclose(out, ref, atol=5e-3, rtol=1e-2), \
        float(jnp.max(jnp.abs(out - ref)))
    assert jnp.allclose(jnp.sum(out, axis=-1), 1.0, atol=1e-3)

    # Non-multiple-of-8 batch (no wrapper-side padding copy; small batches take
    # the single full-array block path, large ragged ones the partial-block path).
    B2 = 13
    emb2 = jax.random.normal(k_emb2, (B2, dim), dtype=jnp.float32)
    out2 = jax.block_until_ready(gate_forward(emb2, weight_t, bias))
    ref2 = reference(emb2)
    assert out2.shape == (B2, 3)
    assert jnp.allclose(out2, ref2, atol=5e-3, rtol=1e-2), \
        float(jnp.max(jnp.abs(out2 - ref2)))

    print("KERNEL_OK")
</pallas_src>

<mosaic_0001>
module attributes {stable_mosaic.version = 11 : i64} {
  func.func @gate_kernel(%arg0: i32, %arg1: memref<8x32xf32, #tpu.memory_space<vmem>>, %arg2: memref<32x3xf32, #tpu.memory_space<vmem>>, %arg3: memref<1x3xf32, #tpu.memory_space<vmem>>, %arg4: memref<8x3xf32, #tpu.memory_space<vmem>>) attributes {dimension_semantics = [#tpu.dimension_semantics<parallel>], iteration_bounds = array<i64: 1>, scalar_prefetch = 0 : i64, scratch_operands = 0 : i64, tpu.core_type = #tpu.core_type<tc>, window_params = [{transform_indices = @transform_0, window_bounds = array<i64: 8, 32>}, {pipeline_mode = #tpu.pipeline_mode<synchronous>, transform_indices = @transform_1, window_bounds = array<i64: 32, 3>}, {pipeline_mode = #tpu.pipeline_mode<synchronous>, transform_indices = @transform_2, window_bounds = array<i64: 1, 3>}, {transform_indices = @transform_3, window_bounds = array<i64: 8, 3>}]} {
    %c0 = arith.constant 0 : index
    %c0_0 = arith.constant 0 : index
    %0 = vector.load %arg1[%c0, %c0_0] : memref<8x32xf32, #tpu.memory_space<vmem>>, vector<8x32xf32>
    %c0_1 = arith.constant 0 : index
    %c0_2 = arith.constant 0 : index
    %1 = vector.load %arg2[%c0_1, %c0_2] : memref<32x3xf32, #tpu.memory_space<vmem>>, vector<32x3xf32>
    %cst = arith.constant dense<0.000000e+00> : vector<8x3xf32>
    %2 = tpu.matmul %0, %1, %cst {dimension_numbers = #tpu.dot_dimension_numbers<[1], [0], [0], [1], [0, 0, 1, 1], [], []>, precision = #tpu.contract_precision<fp32>} : vector<8x32xf32>, vector<32x3xf32>, vector<8x3xf32> -> vector<8x3xf32>
    %c0_3 = arith.constant 0 : index
    %c0_4 = arith.constant 0 : index
    %3 = vector.load %arg3[%c0_3, %c0_4] : memref<1x3xf32, #tpu.memory_space<vmem>>, vector<1x3xf32>
    %4 = vector.broadcast %3 : vector<1x3xf32> to vector<8x3xf32>
    %5 = arith.addf %2, %4 : vector<8x3xf32>
    %6 = vector.extract_strided_slice %5 {offsets = [0, 0], sizes = [8, 1], strides = [1, 1]} : vector<8x3xf32> to vector<8x1xf32>
    %7 = vector.extract_strided_slice %5 {offsets = [0, 1], sizes = [8, 1], strides = [1, 1]} : vector<8x3xf32> to vector<8x1xf32>
    %8 = vector.extract_strided_slice %5 {offsets = [0, 2], sizes = [8, 1], strides = [1, 1]} : vector<8x3xf32> to vector<8x1xf32>
    %9 = arith.maximumf %6, %7 : vector<8x1xf32>
    %10 = arith.maximumf %9, %8 : vector<8x1xf32>
    %11 = vector.broadcast %10 : vector<8x1xf32> to vector<8x3xf32>
    %12 = arith.subf %5, %11 : vector<8x3xf32>
    %13 = math.exp %12 : vector<8x3xf32>
    %14 = vector.extract_strided_slice %13 {offsets = [0, 0], sizes = [8, 1], strides = [1, 1]} : vector<8x3xf32> to vector<8x1xf32>
    %15 = vector.extract_strided_slice %13 {offsets = [0, 1], sizes = [8, 1], strides = [1, 1]} : vector<8x3xf32> to vector<8x1xf32>
    %16 = arith.addf %14, %15 : vector<8x1xf32>
    %17 = vector.extract_strided_slice %13 {offsets = [0, 2], sizes = [8, 1], strides = [1, 1]} : vector<8x3xf32> to vector<8x1xf32>
    %18 = arith.addf %16, %17 : vector<8x1xf32>
    %19 = vector.broadcast %18 : vector<8x1xf32> to vector<8x3xf32>
    %20 = arith.divf %13, %19 : vector<8x3xf32>
    %c0_5 = arith.constant 0 : index
    %c0_6 = arith.constant 0 : index
    %21 = vector.load %arg4[%c0_5, %c0_6] : memref<8x3xf32, #tpu.memory_space<vmem>>, vector<8x3xf32>
    tpu.vector_store %arg4[%c0_5, %c0_6], %20 {strides = array<i32>} : memref<8x3xf32, #tpu.memory_space<vmem>>, vector<8x3xf32>,
    return
  }
  func.func @transform_0(%arg0: i32) -> (i32, i32) {
    %c0_i32 = arith.constant 0 : i32
    %c0_i32_0 = arith.constant 0 : i32
    return %arg0, %c0_i32 : i32, i32
  }
  func.func @transform_1(%arg0: i32) -> (i32, i32) {
    %c0_i32 = arith.constant 0 : i32
    %c0_i32_0 = arith.constant 0 : i32
    %c0_i32_1 = arith.constant 0 : i32
    return %c0_i32, %c0_i32_0 : i32, i32
  }
  func.func @transform_2(%arg0: i32) -> (i32, i32) {
    %c0_i32 = arith.constant 0 : i32
    %c0_i32_0 = arith.constant 0 : i32
    %c0_i32_1 = arith.constant 0 : i32
    return %c0_i32, %c0_i32_0 : i32, i32
  }
  func.func @transform_3(%arg0: i32) -> (i32, i32) {
    %c0_i32 = arith.constant 0 : i32
    %c0_i32_0 = arith.constant 0 : i32
    return %arg0, %c0_i32 : i32, i32
  }
}

module attributes {stable_mosaic.version = 11 : i64} {
  func.func @gate_kernel(%arg0: i32, %arg1: memref<8x32xf32, #tpu.memory_space<vmem>>, %arg2: memref<32x3xf32, #tpu.memory_space<vmem>>, %arg3: memref<1x3xf32, #tpu.memory_space<vmem>>, %arg4: memref<8x3xf32, #tpu.memory_space<vmem>>) attributes {dimension_semantics = [#tpu.dimension_semantics<parallel>], iteration_bounds = array<i64: 1>, scalar_prefetch = 0 : i64, scratch_operands = 0 : i64, tpu.core_type = #tpu.core_type<tc>, window_params = [{transform_indices = @transform_0, window_bounds = array<i64: 8, 32>}, {pipeline_mode = #tpu.pipeline_mode<synchronous>, transform_indices = @transform_1, window_bounds = array<i64: 32, 3>}, {pipeline_mode = #tpu.pipeline_mode<synchronous>, transform_indices = @transform_2, window_bounds = array<i64: 1, 3>}, {transform_indices = @transform_3, window_bounds = array<i64: 8, 3>}]} {
    %c0 = arith.constant 0 : index
    %c0_0 = arith.constant 0 : index
    %0 = vector.load %arg1[%c0, %c0_0] : memref<8x32xf32, #tpu.memory_space<vmem>>, vector<8x32xf32>
    %c0_1 = arith.constant 0 : index
    %c0_2 = arith.constant 0 : index
    %1 = vector.load %arg2[%c0_1, %c0_2] : memref<32x3xf32, #tpu.memory_space<vmem>>, vector<32x3xf32>
    %cst = arith.constant dense<0.000000e+00> : vector<8x3xf32>
    %2 = tpu.matmul %0, %1, %cst {dimension_numbers = #tpu.dot_dimension_numbers<[1], [0], [0], [1], [0, 0, 1, 1], [], []>, precision = #tpu.contract_precision<fp32>} : vector<8x32xf32>, vector<32x3xf32>, vector<8x3xf32> -> vector<8x3xf32>
    %c0_3 = arith.constant 0 : index
    %c0_4 = arith.constant 0 : index
    %3 = vector.load %arg3[%c0_3, %c0_4] : memref<1x3xf32, #tpu.memory_space<vmem>>, vector<1x3xf32>
    %4 = vector.broadcast %3 : vector<1x3xf32> to vector<8x3xf32>
    %5 = arith.addf %2, %4 : vector<8x3xf32>
    %6 = vector.extract_strided_slice %5 {offsets = [0, 0], sizes = [8, 1], strides = [1, 1]} : vector<8x3xf32> to vector<8x1xf32>
    %7 = vector.extract_strided_slice %5 {offsets = [0, 1], sizes = [8, 1], strides = [1, 1]} : vector<8x3xf32> to vector<8x1xf32>
    %8 = vector.extract_strided_slice %5 {offsets = [0, 2], sizes = [8, 1], strides = [1, 1]} : vector<8x3xf32> to vector<8x1xf32>
    %9 = arith.maximumf %6, %7 : vector<8x1xf32>
    %10 = arith.maximumf %9, %8 : vector<8x1xf32>
    %11 = vector.broadcast %10 : vector<8x1xf32> to vector<8x3xf32>
    %12 = arith.subf %5, %11 : vector<8x3xf32>
    %13 = math.exp %12 : vector<8x3xf32>
    %14 = vector.extract_strided_slice %13 {offsets = [0, 0], sizes = [8, 1], strides = [1, 1]} : vector<8x3xf32> to vector<8x1xf32>
    %15 = vector.extract_strided_slice %13 {offsets = [0, 1], sizes = [8, 1], strides = [1, 1]} : vector<8x3xf32> to vector<8x1xf32>
    %16 = arith.addf %14, %15 : vector<8x1xf32>
    %17 = vector.extract_strided_slice %13 {offsets = [0, 2], sizes = [8, 1], strides = [1, 1]} : vector<8x3xf32> to vector<8x1xf32>
    %18 = arith.addf %16, %17 : vector<8x1xf32>
    %19 = vector.broadcast %18 : vector<8x1xf32> to vector<8x3xf32>
    %20 = arith.divf %13, %19 : vector<8x3xf32>
    %c0_5 = arith.constant 0 : index
    %c0_6 = arith.constant 0 : index
    %21 = vector.load %arg4[%c0_5, %c0_6] : memref<8x3xf32, #tpu.memory_space<vmem>>, vector<8x3xf32>
    tpu.vector_store %arg4[%c0_5, %c0_6], %20 {strides = array<i32>} : memref<8x3xf32, #tpu.memory_space<vmem>>, vector<8x3xf32>,
    return
  }
  func.func @transform_0(%arg0: i32) -> (i32, i32) {
    %c0_i32 = arith.constant 0 : i32
    %c0_i32_0 = arith.constant 0 : i32
    return %arg0, %c0_i32 : i32, i32
  }
  func.func @transform_1(%arg0: i32) -> (i32, i32) {
    %c0_i32 = arith.constant 0 : i32
    %c0_i32_0 = arith.constant 0 : i32
    %c0_i32_1 = arith.constant 0 : i32
    return %c0_i32, %c0_i32_0 : i32, i32
  }
  func.func @transform_2(%arg0: i32) -> (i32, i32) {
    %c0_i32 = arith.constant 0 : i32
    %c0_i32_0 = arith.constant 0 : i32
    %c0_i32_1 = arith.constant 0 : i32
    return %c0_i32, %c0_i32_0 : i32, i32
  }
  func.func @transform_3(%arg0: i32) -> (i32, i32) {
    %c0_i32 = arith.constant 0 : i32
    %c0_i32_0 = arith.constant 0 : i32
    return %arg0, %c0_i32 : i32, i32
  }
}

</mosaic_0001>

<llo_original>
// kernel: tpu_custom_call.1
$region0: #{tpu_custom_call.1}
  #allocation0 [shape = 'u32[]', space=smem, size = 0x4, offset = 0x4, fixed_abs, tag = 'smem constant byte address 0x4 - core index']
  #allocation1 [shape = 'u32[144,128]{1,0:T(1,128)}', space=vmem, size = 0x12000, scoped, tag = 'internal scratch']
  %s0 = inlined_call_operand.vmem [shape: f32[8,32], index: 0, kind: input, shape index: {}]
  %s1 = inlined_call_operand.vmem [shape: f32[32,3], index: 1, kind: input, shape index: {}]
  %s2 = inlined_call_operand.vmem [shape: f32[1,3], index: 2, kind: input, shape index: {}]
  %s3 = inlined_call_operand.vmem [shape: f32[8,3], index: 3, kind: output, shape index: {}]
  %s4 = sld [smem:[#allocation0]]
  $region22: #{tpu_custom_call.1} parent=0
    _
  %s6 = ssub.s32 1, %s4
  %s7 = scalar_select 0, %s6, %s4
  // Predicated region
  $region2: #{tpu_custom_call.1} parent=0 // pred_check
    _
  $region3: #{tpu_custom_call.1} parent=0 // pred_check_branch
    %9 = sbr.rel (0) target = $region5
  $region4: #{tpu_custom_call.1} parent=0 // pred_region
    _
  $region5: #{tpu_custom_call.1} parent=0 // pred_fallthru
    _
  // Predicated region
  $region6: #{tpu_custom_call.1} parent=0 // pred_check
    _
  $region7: #{tpu_custom_call.1} parent=0 // pred_check_branch
    %11 = sbr.rel (0) target = $region9
  $region8: #{tpu_custom_call.1} parent=0 // pred_region
    _
  $region9: #{tpu_custom_call.1} parent=0 // pred_fallthru
    _
  // Predicated region
  $region10: #{tpu_custom_call.1} parent=0 // pred_check
    _
  $region11: #{tpu_custom_call.1} parent=0 // pred_check_branch
    %13 = sbr.rel (0) target = $region13
  $region12: #{tpu_custom_call.1} parent=0 // pred_region
    _
  $region13: #{tpu_custom_call.1} parent=0 // pred_fallthru
    _
  %v14 = vld [vmem:[%s0] sm:$0xff]
  %v15 = vld [vmem:[%s1] sm:$0xff]
  %v16 = vld [vmem:[%s1 + $0x8] sm:$0xff]
  %v17 = vld [vmem:[%s1 + $0x10] sm:$0xff]
  %v18 = vld [vmem:[%s1 + $0x18] sm:$0xff]
  %v19 = vld [vmem:[%s2] sm:$0x1]
  %v21 = vlaneseq
  %v22 = vshrl.u32 %v21, 7
  %v23 = vsub.s32 0, %v22
  %v24 = vrot.slane %v19, %v23
  %vm26 = vcmask 261120
  %v28 = vsel %vm26, %v14, 0
  %30 = vmatprep.subr.mxu0 0.0
  %31 = vmatpush1.msra.mxu0 0.0
  %32 = vmatprep.subr.mxu0 0.0
  %33 = vmatpush1.msra.mxu0 0.0
  %34 = vmatprep.subr.mxu0 0.0
  %35 = vmatpush1.msra.mxu0 0.0
  %36 = vmatprep.subr.mxu0 0.0
  %37 = vmatpush1.msra.mxu0 0.0
  %38 = vmatprep.subr.mxu0 0.0
  %39 = vmatpush1.msra.mxu0 0.0
  %40 = vmatprep.subr.mxu0 0.0
  %41 = vmatpush1.msra.mxu0 0.0
  %42 = vmatprep.subr.mxu0 0.0
  %43 = vmatpush1.msra.mxu0 0.0
  %44 = vmatprep.subr.mxu0 0.0
  %45 = vmatpush1.msra.mxu0 0.0
  %46 = vmatprep.subr.mxu0 0.0
  %47 = vmatpush1.msra.mxu0 0.0
  %48 = vmatprep.subr.mxu0 0.0
  %49 = vmatpush1.msra.mxu0 0.0
  %50 = vmatprep.subr.mxu0 0.0
  %51 = vmatpush1.msra.mxu0 0.0
  %52 = vmatprep.subr.mxu0 0.0
  %53 = vmatpush1.msra.mxu0 0.0
  %54 = vmatprep.subr.mxu0 0.0
  %v55 = vand.u32 %v18, 4294901760
  %56 = vmatpush1.msra.mxu0 %v55
  %57 = vmatprep.subr.mxu0 0.0
  %v58 = vand.u32 %v17, 4294901760
  %59 = vmatpush1.msra.mxu0 %v58
  %60 = vmatprep.subr.mxu0 0.0
  %v61 = vand.u32 %v16, 4294901760
  %62 = vmatpush1.msra.mxu0 %v61
  %63 = vmatprep.subr.mxu0 0.0
  %v64 = vand.u32 %v15, 4294901760
  %65 = vmatpush1.msra.mxu0 %v64
  %66 = vmatprep.subr.mxu0 0.0
  %67 = vmatpush2.msra.mxu0 0.0
  %68 = vmatprep.subr.mxu0 0.0
  %69 = vmatpush2.msra.mxu0 0.0
  %70 = vmatprep.subr.mxu0 0.0
  %71 = vmatpush2.msra.mxu0 0.0
  %72 = vmatprep.subr.mxu0 0.0
  %73 = vmatpush2.msra.mxu0 0.0
  %74 = vmatprep.subr.mxu0 0.0
  %75 = vmatpush2.msra.mxu0 0.0
  %76 = vmatprep.subr.mxu0 0.0
  %77 = vmatpush2.msra.mxu0 0.0
  %78 = vmatprep.subr.mxu0 0.0
  %79 = vmatpush2.msra.mxu0 0.0
  %80 = vmatprep.subr.mxu0 0.0
  %81 = vmatpush2.msra.mxu0 0.0
  %82 = vmatprep.subr.mxu0 0.0
  %83 = vmatpush2.msra.mxu0 0.0
  %84 = vmatprep.subr.mxu0 0.0
  %85 = vmatpush2.msra.mxu0 0.0
  %86 = vmatprep.subr.mxu0 0.0
  %87 = vmatpush2.msra.mxu0 0.0
  %88 = vmatprep.subr.mxu0 0.0
  %89 = vmatpush2.msra.mxu0 0.0
  %90 = vmatprep.subr.mxu0 0.0
  %91 = vmatpush2.msra.mxu0 0.0
  %92 = vmatprep.subr.mxu0 0.0
  %93 = vmatpush2.msra.mxu0 0.0
  %94 = vmatprep.subr.mxu0 0.0
  %95 = vmatpush2.msra.mxu0 0.0
  %96 = vmatprep.subr.mxu0 0.0
  %97 = vmatpush2.msra.mxu0 0.0
  %98 = vmatprep.mubr.f32.mxu0 0.0
  %v99 = vand.u32 %v28, 4294901760
  %v100 = vsub.f32 %v28, %v99
  %v101 = vand.u32 %v100, 4294901760
  %v102 = vsub.f32 %v100, %v101
  %v103 = vand.u32 %v102, 4294901760
  %104 = vmatmul.mubr.f32.gmra.mxu0 %v103
  %v105 = vpop.f32.mrf.mxu0
  %v106 = vadd.f32 %v24, %v105
  %v107 = vpop.f32.mrf.mxu0
  %108 = vdwg.mxu0
  %109 = vmatprep.subr.mxu0 0.0
  %110 = vmatpush1.msra.mxu0 0.0
  %111 = vmatprep.subr.mxu0 0.0
  %112 = vmatpush1.msra.mxu0 0.0
  %113 = vmatprep.subr.mxu0 0.0
  %114 = vmatpush1.msra.mxu0 0.0
  %115 = vmatprep.subr.mxu0 0.0
  %116 = vmatpush1.msra.mxu0 0.0
  %117 = vmatprep.subr.mxu0 0.0
  %118 = vmatpush1.msra.mxu0 0.0
  %119 = vmatprep.subr.mxu0 0.0
  %120 = vmatpush1.msra.mxu0 0.0
  %121 = vmatprep.subr.mxu0 0.0
  %122 = vmatpush1.msra.mxu0 0.0
  %123 = vmatprep.subr.mxu0 0.0
  %124 = vmatpush1.msra.mxu0 0.0
  %125 = vmatprep.subr.mxu0 0.0
  %126 = vmatpush1.msra.mxu0 0.0
  %127 = vmatprep.subr.mxu0 0.0
  %128 = vmatpush1.msra.mxu0 0.0
  %129 = vmatprep.subr.mxu0 0.0
  %130 = vmatpush1.msra.mxu0 0.0
  %131 = vmatprep.subr.mxu0 0.0
  %132 = vmatpush1.msra.mxu0 0.0
  %133 = vmatprep.subr.mxu0 0.0
  %v134 = vand.u32 %v18, 4294901760
  %v135 = vsub.f32 %v18, %v134
  %v136 = vand.u32 %v135, 4294901760
  %v137 = vsub.f32 %v135, %v136
  %v138 = vand.u32 %v137, 4294901760
  %139 = vmatpush1.msra.mxu0 %v138
  %140 = vmatprep.subr.mxu0 0.0
  %v141 = vand.u32 %v17, 4294901760
  %v142 = vsub.f32 %v17, %v141
  %v143 = vand.u32 %v142, 4294901760
  %v144 = vsub.f32 %v142, %v143
  %v145 = vand.u32 %v144, 4294901760
  %146 = vmatpush1.msra.mxu0 %v145
  %147 = vmatprep.subr.mxu0 0.0
  %v148 = vand.u32 %v16, 4294901760
  %v149 = vsub.f32 %v16, %v148
  %v150 = vand.u32 %v149, 4294901760
  %v151 = vsub.f32 %v149, %v150
  %v152 = vand.u32 %v151, 4294901760
  %153 = vmatpush1.msra.mxu0 %v152
  %154 = vmatprep.subr.mxu0 0.0
  %v155 = vand.u32 %v15, 4294901760
  %v156 = vsub.f32 %v15, %v155
  %v157 = vand.u32 %v156, 4294901760
  %v158 = vsub.f32 %v156, %v157
  %v159 = vand.u32 %v158, 4294901760
  %160 = vmatpush1.msra.mxu0 %v159
  %161 = vmatprep.subr.mxu0 0.0
  %162 = vmatpush2.msra.mxu0 0.0
  %163 = vmatprep.subr.mxu0 0.0
  %164 = vmatpush2.msra.mxu0 0.0
  %165 = vmatprep.subr.mxu0 0.0
  %166 = vmatpush2.msra.mxu0 0.0
  %167 = vmatprep.subr.mxu0 0.0
  %168 = vmatpush2.msra.mxu0 0.0
  %169 = vmatprep.subr.mxu0 0.0
  %170 = vmatpush2.msra.mxu0 0.0
  %171 = vmatprep.subr.mxu0 0.0
  %172 = vmatpush2.msra.mxu0 0.0
  %173 = vmatprep.subr.mxu0 0.0
  %174 = vmatpush2.msra.mxu0 0.0
  %175 = vmatprep.subr.mxu0 0.0
  %176 = vmatpush2.msra.mxu0 0.0
  %177 = vmatprep.subr.mxu0 0.0
  %178 = vmatpush2.msra.mxu0 0.0
  %179 = vmatprep.subr.mxu0 0.0
  %180 = vmatpush2.msra.mxu0 0.0
  %181 = vmatprep.subr.mxu0 0.0
  %182 = vmatpush2.msra.mxu0 0.0
  %183 = vmatprep.subr.mxu0 0.0
  %184 = vmatpush2.msra.mxu0 0.0
  %185 = vmatprep.subr.mxu0 0.0
  %186 = vmatpush2.msra.mxu0 0.0
  %187 = vmatprep.subr.mxu0 0.0
  %188 = vmatpush2.msra.mxu0 0.0
  %189 = vmatprep.subr.mxu0 0.0
  %190 = vmatpush2.msra.mxu0 0.0
  %191 = vmatprep.subr.mxu0 0.0
  %192 = vmatpush2.msra.mxu0 0.0
  %193 = vmatprep.mubr.f32.mxu0 0.0
  %v194 = vand.u32 %v28, 4294901760
  %195 = vmatmul.mubr.f32.gmra.mxu0 %v194
  %v196 = vpop.f32.mrf.mxu0
  %v197 = vadd.f32 %v106, %v196
  %v198 = vpop.f32.mrf.mxu0
  %199 = vdwg.mxu0
  %200 = vmatprep.subr.mxu0 0.0
  %201 = vmatpush1.msra.mxu0 0.0
  %202 = vmatprep.subr.mxu0 0.0
  %203 = vmatpush1.msra.mxu0 0.0
  %204 = vmatprep.subr.mxu0 0.0
  %205 = vmatpush1.msra.mxu0 0.0
  %206 = vmatprep.subr.mxu0 0.0
  %207 = vmatpush1.msra.mxu0 0.0
  %208 = vmatprep.subr.mxu0 0.0
  %209 = vmatpush1.msra.mxu0 0.0
  %210 = vmatprep.subr.mxu0 0.0
  %211 = vmatpush1.msra.mxu0 0.0
  %212 = vmatprep.subr.mxu0 0.0
  %213 = vmatpush1.msra.mxu0 0.0
  %214 = vmatprep.subr.mxu0 0.0
  %215 = vmatpush1.msra.mxu0 0.0
  %216 = vmatprep.subr.mxu0 0.0
  %217 = vmatpush1.msra.mxu0 0.0
  %218 = vmatprep.subr.mxu0 0.0
  %219 = vmatpush1.msra.mxu0 0.0
  %220 = vmatprep.subr.mxu0 0.0
  %221 = vmatpush1.msra.mxu0 0.0
  %222 = vmatprep.subr.mxu0 0.0
  %223 = vmatpush1.msra.mxu0 0.0
  %224 = vmatprep.subr.mxu0 0.0
  %v225 = vand.u32 %v18, 4294901760
  %v226 = vsub.f32 %v18, %v225
  %227 = vmatpush1.msra.mxu0 %v226
  %228 = vmatprep.subr.mxu0 0.0
  %v229 = vand.u32 %v17, 4294901760
  %v230 = vsub.f32 %v17, %v229
  %231 = vmatpush1.msra.mxu0 %v230
  %232 = vmatprep.subr.mxu0 0.0
  %v233 = vand.u32 %v16, 4294901760
  %v234 = vsub.f32 %v16, %v233
  %235 = vmatpush1.msra.mxu0 %v234
  %236 = vmatprep.subr.mxu0 0.0
  %v237 = vand.u32 %v15, 4294901760
  %v238 = vsub.f32 %v15, %v237
  %239 = vmatpush1.msra.mxu0 %v238
  %240 = vmatprep.subr.mxu0 0.0
  %241 = vmatpush2.msra.mxu0 0.0
  %242 = vmatprep.subr.mxu0 0.0
  %243 = vmatpush2.msra.mxu0 0.0
  %244 = vmatprep.subr.mxu0 0.0
  %245 = vmatpush2.msra.mxu0 0.0
  %246 = vmatprep.subr.mxu0 0.0
  %247 = vmatpush2.msra.mxu0 0.0
  %248 = vmatprep.subr.mxu0 0.0
  %249 = vmatpush2.msra.mxu0 0.0
  %250 = vmatprep.subr.mxu0 0.0
  %251 = vmatpush2.msra.mxu0 0.0
  %252 = vmatprep.subr.mxu0 0.0
  %253 = vmatpush2.msra.mxu0 0.0
  %254 = vmatprep.subr.mxu0 0.0
  %255 = vmatpush2.msra.mxu0 0.0
  %256 = vmatprep.subr.mxu0 0.0
  %257 = vmatpush2.msra.mxu0 0.0
  %258 = vmatprep.subr.mxu0 0.0
  %259 = vmatpush2.msra.mxu0 0.0
  %260 = vmatprep.subr.mxu0 0.0
  %261 = vmatpush2.msra.mxu0 0.0
  %262 = vmatprep.subr.mxu0 0.0
  %263 = vmatpush2.msra.mxu0 0.0
  %264 = vmatprep.subr.mxu0 0.0
  %265 = vmatpush2.msra.mxu0 0.0
  %266 = vmatprep.subr.mxu0 0.0
  %267 = vmatpush2.msra.mxu0 0.0
  %268 = vmatprep.subr.mxu0 0.0
  %269 = vmatpush2.msra.mxu0 0.0
  %270 = vmatprep.subr.mxu0 0.0
  %271 = vmatpush2.msra.mxu0 0.0
  %272 = vmatprep.mubr.f32.mxu0 0.0
  %v273 = vand.u32 %v28, 4294901760
  %v274 = vsub.f32 %v28, %v273
  %275 = vmatmul.mubr.f32.gmra.mxu0 %v274
  %v276 = vpop.f32.mrf.mxu0
  %v277 = vadd.f32 %v197, %v276
  %v278 = vpop.f32.mrf.mxu0
  %279 = vdwg.mxu0
  %280 = vmatprep.subr.mxu0 0.0
  %281 = vmatpush1.msra.mxu0 0.0
  %282 = vmatprep.subr.mxu0 0.0
  %283 = vmatpush1.msra.mxu0 0.0
  %284 = vmatprep.subr.mxu0 0.0
  %285 = vmatpush1.msra.mxu0 0.0
  %286 = vmatprep.subr.mxu0 0.0
  %287 = vmatpush1.msra.mxu0 0.0
  %288 = vmatprep.subr.mxu0 0.0
  %289 = vmatpush1.msra.mxu0 0.0
  %290 = vmatprep.subr.mxu0 0.0
  %291 = vmatpush1.msra.mxu0 0.0
  %292 = vmatprep.subr.mxu0 0.0
  %293 = vmatpush1.msra.mxu0 0.0
  %294 = vmatprep.subr.mxu0 0.0
  %295 = vmatpush1.msra.mxu0 0.0
  %296 = vmatprep.subr.mxu0 0.0
  %297 = vmatpush1.msra.mxu0 0.0
  %298 = vmatprep.subr.mxu0 0.0
  %299 = vmatpush1.msra.mxu0 0.0
  %300 = vmatprep.subr.mxu0 0.0
  %301 = vmatpush1.msra.mxu0 0.0
  %302 = vmatprep.subr.mxu0 0.0
  %303 = vmatpush1.msra.mxu0 0.0
  %304 = vmatprep.subr.mxu0 0.0
  %v305 = vand.u32 %v18, 4294901760
  %306 = vmatpush1.msra.mxu0 %v305
  %307 = vmatprep.subr.mxu0 0.0
  %v308 = vand.u32 %v17, 4294901760
  %309 = vmatpush1.msra.mxu0 %v308
  %310 = vmatprep.subr.mxu0 0.0
  %v311 = vand.u32 %v16, 4294901760
  %312 = vmatpush1.msra.mxu0 %v311
  %313 = vmatprep.subr.mxu0 0.0
  %v314 = vand.u32 %v15, 4294901760
  %315 = vmatpush1.msra.mxu0 %v314
  %316 = vmatprep.subr.mxu0 0.0
  %317 = vmatpush2.msra.mxu0 0.0
  %318 = vmatprep.subr.mxu0 0.0
  %319 = vmatpush2.msra.mxu0 0.0
  %320 = vmatprep.subr.mxu0 0.0
  %321 = vmatpush2.msra.mxu0 0.0
  %322 = vmatprep.subr.mxu0 0.0
  %323 = vmatpush2.msra.mxu0 0.0
  %324 = vmatprep.subr.mxu0 0.0
  %325 = vmatpush2.msra.mxu0 0.0
  %326 = vmatprep.subr.mxu0 0.0
  %327 = vmatpush2.msra.mxu0 0.0
  %328 = vmatprep.subr.mxu0 0.0
  %329 = vmatpush2.msra.mxu0 0.0
  %330 = vmatprep.subr.mxu0 0.0
  %331 = vmatpush2.msra.mxu0 0.0
  %332 = vmatprep.subr.mxu0 0.0
  %333 = vmatpush2.msra.mxu0 0.0
  %334 = vmatprep.subr.mxu0 0.0
  %335 = vmatpush2.msra.mxu0 0.0
  %336 = vmatprep.subr.mxu0 0.0
  %337 = vmatpush2.msra.mxu0 0.0
  %338 = vmatprep.subr.mxu0 0.0
  %339 = vmatpush2.msra.mxu0 0.0
  %340 = vmatprep.subr.mxu0 0.0
  %341 = vmatpush2.msra.mxu0 0.0
  %342 = vmatprep.subr.mxu0 0.0
  %343 = vmatpush2.msra.mxu0 0.0
  %344 = vmatprep.subr.mxu0 0.0
  %345 = vmatpush2.msra.mxu0 0.0
  %346 = vmatprep.subr.mxu0 0.0
  %347 = vmatpush2.msra.mxu0 0.0
  %348 = vmatprep.mubr.f32.mxu0 0.0
  %v349 = vand.u32 %v28, 4294901760
  %v350 = vsub.f32 %v28, %v349
  %v351 = vand.u32 %v350, 4294901760
  %352 = vmatmul.mubr.f32.gmra.mxu0 %v351
  %v353 = vpop.f32.mrf.mxu0
  %v354 = vadd.f32 %v277, %v353
  %v355 = vpop.f32.mrf.mxu0
  %356 = vdwg.mxu0
  %357 = vmatprep.subr.mxu0 0.0
  %358 = vmatpush1.msra.mxu0 0.0
  %359 = vmatprep.subr.mxu0 0.0
  %360 = vmatpush1.msra.mxu0 0.0
  %361 = vmatprep.subr.mxu0 0.0
  %362 = vmatpush1.msra.mxu0 0.0
  %363 = vmatprep.subr.mxu0 0.0
  %364 = vmatpush1.msra.mxu0 0.0
  %365 = vmatprep.subr.mxu0 0.0
  %366 = vmatpush1.msra.mxu0 0.0
  %367 = vmatprep.subr.mxu0 0.0
  %368 = vmatpush1.msra.mxu0 0.0
  %369 = vmatprep.subr.mxu0 0.0
  %370 = vmatpush1.msra.mxu0 0.0
  %371 = vmatprep.subr.mxu0 0.0
  %372 = vmatpush1.msra.mxu0 0.0
  %373 = vmatprep.subr.mxu0 0.0
  %374 = vmatpush1.msra.mxu0 0.0
  %375 = vmatprep.subr.mxu0 0.0
  %376 = vmatpush1.msra.mxu0 0.0
  %377 = vmatprep.subr.mxu0 0.0
  %378 = vmatpush1.msra.mxu0 0.0
  %379 = vmatprep.subr.mxu0 0.0
  %380 = vmatpush1.msra.mxu0 0.0
  %381 = vmatprep.subr.mxu0 0.0
  %v382 = vand.u32 %v18, 4294901760
  %v383 = vsub.f32 %v18, %v382
  %v384 = vand.u32 %v383, 4294901760
  %385 = vmatpush1.msra.mxu0 %v384
  %386 = vmatprep.subr.mxu0 0.0
  %v387 = vand.u32 %v17, 4294901760
  %v388 = vsub.f32 %v17, %v387
  %v389 = vand.u32 %v388, 4294901760
  %390 = vmatpush1.msra.mxu0 %v389
  %391 = vmatprep.subr.mxu0 0.0
  %v392 = vand.u32 %v16, 4294901760
  %v393 = vsub.f32 %v16, %v392
  %v394 = vand.u32 %v393, 4294901760
  %395 = vmatpush1.msra.mxu0 %v394
  %396 = vmatprep.subr.mxu0 0.0
  %v397 = vand.u32 %v15, 4294901760
  %v398 = vsub.f32 %v15, %v397
  %v399 = vand.u32 %v398, 4294901760
  %400 = vmatpush1.msra.mxu0 %v399
  %401 = vmatprep.subr.mxu0 0.0
  %402 = vmatpush2.msra.mxu0 0.0
  %403 = vmatprep.subr.mxu0 0.0
  %404 = vmatpush2.msra.mxu0 0.0
  %405 = vmatprep.subr.mxu0 0.0
  %406 = vmatpush2.msra.mxu0 0.0
  %407 = vmatprep.subr.mxu0 0.0
  %408 = vmatpush2.msra.mxu0 0.0
  %409 = vmatprep.subr.mxu0 0.0
  %410 = vmatpush2.msra.mxu0 0.0
  %411 = vmatprep.subr.mxu0 0.0
  %412 = vmatpush2.msra.mxu0 0.0
  %413 = vmatprep.subr.mxu0 0.0
  %414 = vmatpush2.msra.mxu0 0.0
  %415 = vmatprep.subr.mxu0 0.0
  %416 = vmatpush2.msra.mxu0 0.0
  %417 = vmatprep.subr.mxu0 0.0
  %418 = vmatpush2.msra.mxu0 0.0
  %419 = vmatprep.subr.mxu0 0.0
  %420 = vmatpush2.msra.mxu0 0.0
  %421 = vmatprep.subr.mxu0 0.0
  %422 = vmatpush2.msra.mxu0 0.0
  %423 = vmatprep.subr.mxu0 0.0
  %424 = vmatpush2.msra.mxu0 0.0
  %425 = vmatprep.subr.mxu0 0.0
  %426 = vmatpush2.msra.mxu0 0.0
  %427 = vmatprep.subr.mxu0 0.0
  %428 = vmatpush2.msra.mxu0 0.0
  %429 = vmatprep.subr.mxu0 0.0
  %430 = vmatpush2.msra.mxu0 0.0
  %431 = vmatprep.subr.mxu0 0.0
  %432 = vmatpush2.msra.mxu0 0.0
  %433 = vmatprep.mubr.f32.mxu0 0.0
  %v434 = vand.u32 %v28, 4294901760
  %435 = vmatmul.mubr.f32.gmra.mxu0 %v434
  %v436 = vpop.f32.mrf.mxu0
  %v437 = vadd.f32 %v354, %v436
  %v438 = vpop.f32.mrf.mxu0
  %439 = vdwg.mxu0
  %440 = vmatprep.subr.mxu0 0.0
  %441 = vmatpush1.msra.mxu0 0.0
  %442 = vmatprep.subr.mxu0 0.0
  %443 = vmatpush1.msra.mxu0 0.0
  %444 = vmatprep.subr.mxu0 0.0
  %445 = vmatpush1.msra.mxu0 0.0
  %446 = vmatprep.subr.mxu0 0.0
  %447 = vmatpush1.msra.mxu0 0.0
  %448 = vmatprep.subr.mxu0 0.0
  %449 = vmatpush1.msra.mxu0 0.0
  %450 = vmatprep.subr.mxu0 0.0
  %451 = vmatpush1.msra.mxu0 0.0
  %452 = vmatprep.subr.mxu0 0.0
  %453 = vmatpush1.msra.mxu0 0.0
  %454 = vmatprep.subr.mxu0 0.0
  %455 = vmatpush1.msra.mxu0 0.0
  %456 = vmatprep.subr.mxu0 0.0
  %457 = vmatpush1.msra.mxu0 0.0
  %458 = vmatprep.subr.mxu0 0.0
  %459 = vmatpush1.msra.mxu0 0.0
  %460 = vmatprep.subr.mxu0 0.0
  %461 = vmatpush1.msra.mxu0 0.0
  %462 = vmatprep.subr.mxu0 0.0
  %463 = vmatpush1.msra.mxu0 0.0
  %464 = vmatprep.subr.mxu0 0.0
  %v465 = vand.u32 %v18, 4294901760
  %466 = vmatpush1.msra.mxu0 %v465
  %467 = vmatprep.subr.mxu0 0.0
  %v468 = vand.u32 %v17, 4294901760
  %469 = vmatpush1.msra.mxu0 %v468
  %470 = vmatprep.subr.mxu0 0.0
  %v471 = vand.u32 %v16, 4294901760
  %472 = vmatpush1.msra.mxu0 %v471
  %473 = vmatprep.subr.mxu0 0.0
  %v474 = vand.u32 %v15, 4294901760
  %475 = vmatpush1.msra.mxu0 %v474
  %476 = vmatprep.subr.mxu0 0.0
  %477 = vmatpush2.msra.mxu0 0.0
  %478 = vmatprep.subr.mxu0 0.0
  %479 = vmatpush2.msra.mxu0 0.0
  %480 = vmatprep.subr.mxu0 0.0
  %481 = vmatpush2.msra.mxu0 0.0
  %482 = vmatprep.subr.mxu0 0.0
  %483 = vmatpush2.msra.mxu0 0.0
  %484 = vmatprep.subr.mxu0 0.0
  %485 = vmatpush2.msra.mxu0 0.0
  %486 = vmatprep.subr.mxu0 0.0
  %487 = vmatpush2.msra.mxu0 0.0
  %488 = vmatprep.subr.mxu0 0.0
  %489 = vmatpush2.msra.mxu0 0.0
  %490 = vmatprep.subr.mxu0 0.0
  %491 = vmatpush2.msra.mxu0 0.0
  %492 = vmatprep.subr.mxu0 0.0
  %493 = vmatpush2.msra.mxu0 0.0
  %494 = vmatprep.subr.mxu0 0.0
  %495 = vmatpush2.msra.mxu0 0.0
  %496 = vmatprep.subr.mxu0 0.0
  %497 = vmatpush2.msra.mxu0 0.0
  %498 = vmatprep.subr.mxu0 0.0
  %499 = vmatpush2.msra.mxu0 0.0
  %500 = vmatprep.subr.mxu0 0.0
  %501 = vmatpush2.msra.mxu0 0.0
  %502 = vmatprep.subr.mxu0 0.0
  %503 = vmatpush2.msra.mxu0 0.0
  %504 = vmatprep.subr.mxu0 0.0
  %505 = vmatpush2.msra.mxu0 0.0
  %506 = vmatprep.subr.mxu0 0.0
  %507 = vmatpush2.msra.mxu0 0.0
  %508 = vmatprep.mubr.f32.mxu0 0.0
  %v509 = vand.u32 %v28, 4294901760
  %510 = vmatmul.mubr.f32.gmra.mxu0 %v509
  %v511 = vpop.f32.mrf.mxu0
  %v512 = vadd.f32 %v437, %v511
  %v513 = vpop.f32.mrf.mxu0
  %514 = vdwg.mxu0
  %516 = vrot.lane.b32.xlu0 %v512, 127
  %v517 = vpop.permute.xlu0 %516
  %v519 = vmax.f32 %v512, %v517
  %520 = vrot.lane.b32.xlu0 %v512, 126
  %v521 = vpop.permute.xlu0 %520
  %v523 = vmax.f32 %v519, %v521
  %525 = vset.pattern.permute.xlu0 0
  %526 = vperm.xlu0 %525, %v523
  %v527 = vpop.permute.xlu0 %526
  %v529 = vsub.f32 %v512, %v527
  %v530 = vmul.f32 %v529, 1.442695
  %v531 = vpow.pop %v530
  %533 = vrot.lane.b32.xlu0 %v531, 127
  %v534 = vpop.permute.xlu0 %533
  %v536 = vadd.f32 %v531, %v534
  %537 = vrot.lane.b32.xlu0 %v531, 126
  %v538 = vpop.permute.xlu0 %537
  %v540 = vadd.f32 %v536, %v538
  %542 = vset.pattern.permute.xlu0 0
  %543 = vperm.xlu0 %542, %v540
  %v544 = vpop.permute.xlu0 %543
  %v546 = vrcp.pop %v544
  %v547 = vmul.f32 %v531, %v546
  %vm548 = vcmask 23552
  %549 = vst.msk [vmem:[%s3] sm:$0xff] %vm548, %v547
  // Predicated region
  $region14: #{tpu_custom_call.1} parent=0 // pred_check
    _
  $region15: #{tpu_custom_call.1} parent=0 // pred_check_branch
    %551 = sbr.rel (0) target = $region17
  $region16: #{tpu_custom_call.1} parent=0 // pred_region
    _
  $region17: #{tpu_custom_call.1} parent=0 // pred_fallthru
    _
  // Predicated region
  $region18: #{tpu_custom_call.1} parent=0 // pred_check
    _
  $region19: #{tpu_custom_call.1} parent=0 // pred_check_branch
    %553 = sbr.rel (0) target = $region21
  $region20: #{tpu_custom_call.1} parent=0 // pred_region
    _
  $region21: #{tpu_custom_call.1} parent=0 // pred_fallthru
    _

// kernel: tpu_custom_call.1
$region0: #{tpu_custom_call.1}
  #allocation0 [shape = 'u32[]', space=smem, size = 0x4, offset = 0x4, fixed_abs, tag = 'smem constant byte address 0x4 - core index']
  #allocation1 [shape = 'u32[144,128]{1,0:T(1,128)}', space=vmem, size = 0x12000, scoped, tag = 'internal scratch']
  %s0 = inlined_call_operand.vmem [shape: f32[8,32], index: 0, kind: input, shape index: {}]
  %s1 = inlined_call_operand.vmem [shape: f32[32,3], index: 1, kind: input, shape index: {}]
  %s2 = inlined_call_operand.vmem [shape: f32[1,3], index: 2, kind: input, shape index: {}]
  %s3 = inlined_call_operand.vmem [shape: f32[8,3], index: 3, kind: output, shape index: {}]
  %s4 = sld [smem:[#allocation0]]
  $region22: #{tpu_custom_call.1} parent=0
    _
  %s6 = ssub.s32 1, %s4
  %s7 = scalar_select 0, %s6, %s4
  // Predicated region
  $region2: #{tpu_custom_call.1} parent=0 // pred_check
    _
  $region3: #{tpu_custom_call.1} parent=0 // pred_check_branch
    %9 = sbr.rel (0) target = $region5
  $region4: #{tpu_custom_call.1} parent=0 // pred_region
    _
  $region5: #{tpu_custom_call.1} parent=0 // pred_fallthru
    _
  // Predicated region
  $region6: #{tpu_custom_call.1} parent=0 // pred_check
    _
  $region7: #{tpu_custom_call.1} parent=0 // pred_check_branch
    %11 = sbr.rel (0) target = $region9
  $region8: #{tpu_custom_call.1} parent=0 // pred_region
    _
  $region9: #{tpu_custom_call.1} parent=0 // pred_fallthru
    _
  // Predicated region
  $region10: #{tpu_custom_call.1} parent=0 // pred_check
    _
  $region11: #{tpu_custom_call.1} parent=0 // pred_check_branch
    %13 = sbr.rel (0) target = $region13
  $region12: #{tpu_custom_call.1} parent=0 // pred_region
    _
  $region13: #{tpu_custom_call.1} parent=0 // pred_fallthru
    _
  %v14 = vld [vmem:[%s0] sm:$0xff]
  %v15 = vld [vmem:[%s1] sm:$0xff]
  %v16 = vld [vmem:[%s1 + $0x8] sm:$0xff]
  %v17 = vld [vmem:[%s1 + $0x10] sm:$0xff]
  %v18 = vld [vmem:[%s1 + $0x18] sm:$0xff]
  %v19 = vld [vmem:[%s2] sm:$0x1]
  %v21 = vlaneseq
  %v22 = vshrl.u32 %v21, 7
  %v23 = vsub.s32 0, %v22
  %v24 = vrot.slane %v19, %v23
  %vm26 = vcmask 261120
  %v28 = vsel %vm26, %v14, 0
  %30 = vmatprep.subr.mxu0 0.0
  %31 = vmatpush1.msra.mxu0 0.0
  %32 = vmatprep.subr.mxu0 0.0
  %33 = vmatpush1.msra.mxu0 0.0
  %34 = vmatprep.subr.mxu0 0.0
  %35 = vmatpush1.msra.mxu0 0.0
  %36 = vmatprep.subr.mxu0 0.0
  %37 = vmatpush1.msra.mxu0 0.0
  %38 = vmatprep.subr.mxu0 0.0
  %39 = vmatpush1.msra.mxu0 0.0
  %40 = vmatprep.subr.mxu0 0.0
  %41 = vmatpush1.msra.mxu0 0.0
  %42 = vmatprep.subr.mxu0 0.0
  %43 = vmatpush1.msra.mxu0 0.0
  %44 = vmatprep.subr.mxu0 0.0
  %45 = vmatpush1.msra.mxu0 0.0
  %46 = vmatprep.subr.mxu0 0.0
  %47 = vmatpush1.msra.mxu0 0.0
  %48 = vmatprep.subr.mxu0 0.0
  %49 = vmatpush1.msra.mxu0 0.0
  %50 = vmatprep.subr.mxu0 0.0
  %51 = vmatpush1.msra.mxu0 0.0
  %52 = vmatprep.subr.mxu0 0.0
  %53 = vmatpush1.msra.mxu0 0.0
  %54 = vmatprep.subr.mxu0 0.0
  %v55 = vand.u32 %v18, 4294901760
  %56 = vmatpush1.msra.mxu0 %v55
  %57 = vmatprep.subr.mxu0 0.0
  %v58 = vand.u32 %v17, 4294901760
  %59 = vmatpush1.msra.mxu0 %v58
  %60 = vmatprep.subr.mxu0 0.0
  %v61 = vand.u32 %v16, 4294901760
  %62 = vmatpush1.msra.mxu0 %v61
  %63 = vmatprep.subr.mxu0 0.0
  %v64 = vand.u32 %v15, 4294901760
  %65 = vmatpush1.msra.mxu0 %v64
  %66 = vmatprep.subr.mxu0 0.0
  %67 = vmatpush2.msra.mxu0 0.0
  %68 = vmatprep.subr.mxu0 0.0
  %69 = vmatpush2.msra.mxu0 0.0
  %70 = vmatprep.subr.mxu0 0.0
  %71 = vmatpush2.msra.mxu0 0.0
  %72 = vmatprep.subr.mxu0 0.0
  %73 = vmatpush2.msra.mxu0 0.0
  %74 = vmatprep.subr.mxu0 0.0
  %75 = vmatpush2.msra.mxu0 0.0
  %76 = vmatprep.subr.mxu0 0.0
  %77 = vmatpush2.msra.mxu0 0.0
  %78 = vmatprep.subr.mxu0 0.0
  %79 = vmatpush2.msra.mxu0 0.0
  %80 = vmatprep.subr.mxu0 0.0
  %81 = vmatpush2.msra.mxu0 0.0
  %82 = vmatprep.subr.mxu0 0.0
  %83 = vmatpush2.msra.mxu0 0.0
  %84 = vmatprep.subr.mxu0 0.0
  %85 = vmatpush2.msra.mxu0 0.0
  %86 = vmatprep.subr.mxu0 0.0
  %87 = vmatpush2.msra.mxu0 0.0
  %88 = vmatprep.subr.mxu0 0.0
  %89 = vmatpush2.msra.mxu0 0.0
  %90 = vmatprep.subr.mxu0 0.0
  %91 = vmatpush2.msra.mxu0 0.0
  %92 = vmatprep.subr.mxu0 0.0
  %93 = vmatpush2.msra.mxu0 0.0
  %94 = vmatprep.subr.mxu0 0.0
  %95 = vmatpush2.msra.mxu0 0.0
  %96 = vmatprep.subr.mxu0 0.0
  %97 = vmatpush2.msra.mxu0 0.0
  %98 = vmatprep.mubr.f32.mxu0 0.0
  %v99 = vand.u32 %v28, 4294901760
  %v100 = vsub.f32 %v28, %v99
  %v101 = vand.u32 %v100, 4294901760
  %v102 = vsub.f32 %v100, %v101
  %v103 = vand.u32 %v102, 4294901760
  %104 = vmatmul.mubr.f32.gmra.mxu0 %v103
  %v105 = vpop.f32.mrf.mxu0
  %v106 = vadd.f32 %v24, %v105
  %v107 = vpop.f32.mrf.mxu0
  %108 = vdwg.mxu0
  %109 = vmatprep.subr.mxu0 0.0
  %110 = vmatpush1.msra.mxu0 0.0
  %111 = vmatprep.subr.mxu0 0.0
  %112 = vmatpush1.msra.mxu0 0.0
  %113 = vmatprep.subr.mxu0 0.0
  %114 = vmatpush1.msra.mxu0 0.0
  %115 = vmatprep.subr.mxu0 0.0
  %116 = vmatpush1.msra.mxu0 0.0
  %117 = vmatprep.subr.mxu0 0.0
  %118 = vmatpush1.msra.mxu0 0.0
  %119 = vmatprep.subr.mxu0 0.0
  %120 = vmatpush1.msra.mxu0 0.0
  %121 = vmatprep.subr.mxu0 0.0
  %122 = vmatpush1.msra.mxu0 0.0
  %123 = vmatprep.subr.mxu0 0.0
  %124 = vmatpush1.msra.mxu0 0.0
  %125 = vmatprep.subr.mxu0 0.0
  %126 = vmatpush1.msra.mxu0 0.0
  %127 = vmatprep.subr.mxu0 0.0
  %128 = vmatpush1.msra.mxu0 0.0
  %129 = vmatprep.subr.mxu0 0.0
  %130 = vmatpush1.msra.mxu0 0.0
  %131 = vmatprep.subr.mxu0 0.0
  %132 = vmatpush1.msra.mxu0 0.0
  %133 = vmatprep.subr.mxu0 0.0
  %v134 = vand.u32 %v18, 4294901760
  %v135 = vsub.f32 %v18, %v134
  %v136 = vand.u32 %v135, 4294901760
  %v137 = vsub.f32 %v135, %v136
  %v138 = vand.u32 %v137, 4294901760
  %139 = vmatpush1.msra.mxu0 %v138
  %140 = vmatprep.subr.mxu0 0.0
  %v141 = vand.u32 %v17, 4294901760
  %v142 = vsub.f32 %v17, %v141
  %v143 = vand.u32 %v142, 4294901760
  %v144 = vsub.f32 %v142, %v143
  %v145 = vand.u32 %v144, 4294901760
  %146 = vmatpush1.msra.mxu0 %v145
  %147 = vmatprep.subr.mxu0 0.0
  %v148 = vand.u32 %v16, 4294901760
  %v149 = vsub.f32 %v16, %v148
  %v150 = vand.u32 %v149, 4294901760
  %v151 = vsub.f32 %v149, %v150
  %v152 = vand.u32 %v151, 4294901760
  %153 = vmatpush1.msra.mxu0 %v152
  %154 = vmatprep.subr.mxu0 0.0
  %v155 = vand.u32 %v15, 4294901760
  %v156 = vsub.f32 %v15, %v155
  %v157 = vand.u32 %v156, 4294901760
  %v158 = vsub.f32 %v156, %v157
  %v159 = vand.u32 %v158, 4294901760
  %160 = vmatpush1.msra.mxu0 %v159
  %161 = vmatprep.subr.mxu0 0.0
  %162 = vmatpush2.msra.mxu0 0.0
  %163 = vmatprep.subr.mxu0 0.0
  %164 = vmatpush2.msra.mxu0 0.0
  %165 = vmatprep.subr.mxu0 0.0
  %166 = vmatpush2.msra.mxu0 0.0
  %167 = vmatprep.subr.mxu0 0.0
  %168 = vmatpush2.msra.mxu0 0.0
  %169 = vmatprep.subr.mxu0 0.0
  %170 = vmatpush2.msra.mxu0 0.0
  %171 = vmatprep.subr.mxu0 0.0
  %172 = vmatpush2.msra.mxu0 0.0
  %173 = vmatprep.subr.mxu0 0.0
  %174 = vmatpush2.msra.mxu0 0.0
  %175 = vmatprep.subr.mxu0 0.0
  %176 = vmatpush2.msra.mxu0 0.0
  %177 = vmatprep.subr.mxu0 0.0
  %178 = vmatpush2.msra.mxu0 0.0
  %179 = vmatprep.subr.mxu0 0.0
  %180 = vmatpush2.msra.mxu0 0.0
  %181 = vmatprep.subr.mxu0 0.0
  %182 = vmatpush2.msra.mxu0 0.0
  %183 = vmatprep.subr.mxu0 0.0
  %184 = vmatpush2.msra.mxu0 0.0
  %185 = vmatprep.subr.mxu0 0.0
  %186 = vmatpush2.msra.mxu0 0.0
  %187 = vmatprep.subr.mxu0 0.0
  %188 = vmatpush2.msra.mxu0 0.0
  %189 = vmatprep.subr.mxu0 0.0
  %190 = vmatpush2.msra.mxu0 0.0
  %191 = vmatprep.subr.mxu0 0.0
  %192 = vmatpush2.msra.mxu0 0.0
  %193 = vmatprep.mubr.f32.mxu0 0.0
  %v194 = vand.u32 %v28, 4294901760
  %195 = vmatmul.mubr.f32.gmra.mxu0 %v194
  %v196 = vpop.f32.mrf.mxu0
  %v197 = vadd.f32 %v106, %v196
  %v198 = vpop.f32.mrf.mxu0
  %199 = vdwg.mxu0
  %200 = vmatprep.subr.mxu0 0.0
  %201 = vmatpush1.msra.mxu0 0.0
  %202 = vmatprep.subr.mxu0 0.0
  %203 = vmatpush1.msra.mxu0 0.0
  %204 = vmatprep.subr.mxu0 0.0
  %205 = vmatpush1.msra.mxu0 0.0
  %206 = vmatprep.subr.mxu0 0.0
  %207 = vmatpush1.msra.mxu0 0.0
  %208 = vmatprep.subr.mxu0 0.0
  %209 = vmatpush1.msra.mxu0 0.0
  %210 = vmatprep.subr.mxu0 0.0
  %211 = vmatpush1.msra.mxu0 0.0
  %212 = vmatprep.subr.mxu0 0.0
  %213 = vmatpush1.msra.mxu0 0.0
  %214 = vmatprep.subr.mxu0 0.0
  %215 = vmatpush1.msra.mxu0 0.0
  %216 = vmatprep.subr.mxu0 0.0
  %217 = vmatpush1.msra.mxu0 0.0
  %218 = vmatprep.subr.mxu0 0.0
  %219 = vmatpush1.msra.mxu0 0.0
  %220 = vmatprep.subr.mxu0 0.0
  %221 = vmatpush1.msra.mxu0 0.0
  %222 = vmatprep.subr.mxu0 0.0
  %223 = vmatpush1.msra.mxu0 0.0
  %224 = vmatprep.subr.mxu0 0.0
  %v225 = vand.u32 %v18, 4294901760
  %v226 = vsub.f32 %v18, %v225
  %227 = vmatpush1.msra.mxu0 %v226
  %228 = vmatprep.subr.mxu0 0.0
  %v229 = vand.u32 %v17, 4294901760
  %v230 = vsub.f32 %v17, %v229
  %231 = vmatpush1.msra.mxu0 %v230
  %232 = vmatprep.subr.mxu0 0.0
  %v233 = vand.u32 %v16, 4294901760
  %v234 = vsub.f32 %v16, %v233
  %235 = vmatpush1.msra.mxu0 %v234
  %236 = vmatprep.subr.mxu0 0.0
  %v237 = vand.u32 %v15, 4294901760
  %v238 = vsub.f32 %v15, %v237
  %239 = vmatpush1.msra.mxu0 %v238
  %240 = vmatprep.subr.mxu0 0.0
  %241 = vmatpush2.msra.mxu0 0.0
  %242 = vmatprep.subr.mxu0 0.0
  %243 = vmatpush2.msra.mxu0 0.0
  %244 = vmatprep.subr.mxu0 0.0
  %245 = vmatpush2.msra.mxu0 0.0
  %246 = vmatprep.subr.mxu0 0.0
  %247 = vmatpush2.msra.mxu0 0.0
  %248 = vmatprep.subr.mxu0 0.0
  %249 = vmatpush2.msra.mxu0 0.0
  %250 = vmatprep.subr.mxu0 0.0
  %251 = vmatpush2.msra.mxu0 0.0
  %252 = vmatprep.subr.mxu0 0.0
  %253 = vmatpush2.msra.mxu0 0.0
  %254 = vmatprep.subr.mxu0 0.0
  %255 = vmatpush2.msra.mxu0 0.0
  %256 = vmatprep.subr.mxu0 0.0
  %257 = vmatpush2.msra.mxu0 0.0
  %258 = vmatprep.subr.mxu0 0.0
  %259 = vmatpush2.msra.mxu0 0.0
  %260 = vmatprep.subr.mxu0 0.0
  %261 = vmatpush2.msra.mxu0 0.0
  %262 = vmatprep.subr.mxu0 0.0
  %263 = vmatpush2.msra.mxu0 0.0
  %264 = vmatprep.subr.mxu0 0.0
  %265 = vmatpush2.msra.mxu0 0.0
  %266 = vmatprep.subr.mxu0 0.0
  %267 = vmatpush2.msra.mxu0 0.0
  %268 = vmatprep.subr.mxu0 0.0
  %269 = vmatpush2.msra.mxu0 0.0
  %270 = vmatprep.subr.mxu0 0.0
  %271 = vmatpush2.msra.mxu0 0.0
  %272 = vmatprep.mubr.f32.mxu0 0.0
  %v273 = vand.u32 %v28, 4294901760
  %v274 = vsub.f32 %v28, %v273
  %275 = vmatmul.mubr.f32.gmra.mxu0 %v274
  %v276 = vpop.f32.mrf.mxu0
  %v277 = vadd.f32 %v197, %v276
  %v278 = vpop.f32.mrf.mxu0
  %279 = vdwg.mxu0
  %280 = vmatprep.subr.mxu0 0.0
  %281 = vmatpush1.msra.mxu0 0.0
  %282 = vmatprep.subr.mxu0 0.0
  %283 = vmatpush1.msra.mxu0 0.0
  %284 = vmatprep.subr.mxu0 0.0
  %285 = vmatpush1.msra.mxu0 0.0
  %286 = vmatprep.subr.mxu0 0.0
  %287 = vmatpush1.msra.mxu0 0.0
  %288 = vmatprep.subr.mxu0 0.0
  %289 = vmatpush1.msra.mxu0 0.0
  %290 = vmatprep.subr.mxu0 0.0
  %291 = vmatpush1.msra.mxu0 0.0
  %292 = vmatprep.subr.mxu0 0.0
  %293 = vmatpush1.msra.mxu0 0.0
  %294 = vmatprep.subr.mxu0 0.0
  %295 = vmatpush1.msra.mxu0 0.0
  %296 = vmatprep.subr.mxu0 0.0
  %297 = vmatpush1.msra.mxu0 0.0
  %298 = vmatprep.subr.mxu0 0.0
  %299 = vmatpush1.msra.mxu0 0.0
  %300 = vmatprep.subr.mxu0 0.0
  %301 = vmatpush1.msra.mxu0 0.0
  %302 = vmatprep.subr.mxu0 0.0
  %303 = vmatpush1.msra.mxu0 0.0
  %304 = vmatprep.subr.mxu0 0.0
  %v305 = vand.u32 %v18, 4294901760
  %306 = vmatpush1.msra.mxu0 %v305
  %307 = vmatprep.subr.mxu0 0.0
  %v308 = vand.u32 %v17, 4294901760
  %309 = vmatpush1.msra.mxu0 %v308
  %310 = vmatprep.subr.mxu0 0.0
  %v311 = vand.u32 %v16, 4294901760
  %312 = vmatpush1.msra.mxu0 %v311
  %313 = vmatprep.subr.mxu0 0.0
  %v314 = vand.u32 %v15, 4294901760
  %315 = vmatpush1.msra.mxu0 %v314
  %316 = vmatprep.subr.mxu0 0.0
  %317 = vmatpush2.msra.mxu0 0.0
  %318 = vmatprep.subr.mxu0 0.0
  %319 = vmatpush2.msra.mxu0 0.0
  %320 = vmatprep.subr.mxu0 0.0
  %321 = vmatpush2.msra.mxu0 0.0
  %322 = vmatprep.subr.mxu0 0.0
  %323 = vmatpush2.msra.mxu0 0.0
  %324 = vmatprep.subr.mxu0 0.0
  %325 = vmatpush2.msra.mxu0 0.0
  %326 = vmatprep.subr.mxu0 0.0
  %327 = vmatpush2.msra.mxu0 0.0
  %328 = vmatprep.subr.mxu0 0.0
  %329 = vmatpush2.msra.mxu0 0.0
  %330 = vmatprep.subr.mxu0 0.0
  %331 = vmatpush2.msra.mxu0 0.0
  %332 = vmatprep.subr.mxu0 0.0
  %333 = vmatpush2.msra.mxu0 0.0
  %334 = vmatprep.subr.mxu0 0.0
  %335 = vmatpush2.msra.mxu0 0.0
  %336 = vmatprep.subr.mxu0 0.0
  %337 = vmatpush2.msra.mxu0 0.0
  %338 = vmatprep.subr.mxu0 0.0
  %339 = vmatpush2.msra.mxu0 0.0
  %340 = vmatprep.subr.mxu0 0.0
  %341 = vmatpush2.msra.mxu0 0.0
  %342 = vmatprep.subr.mxu0 0.0
  %343 = vmatpush2.msra.mxu0 0.0
  %344 = vmatprep.subr.mxu0 0.0
  %345 = vmatpush2.msra.mxu0 0.0
  %346 = vmatprep.subr.mxu0 0.0
  %347 = vmatpush2.msra.mxu0 0.0
  %348 = vmatprep.mubr.f32.mxu0 0.0
  %v349 = vand.u32 %v28, 4294901760
  %v350 = vsub.f32 %v28, %v349
  %v351 = vand.u32 %v350, 4294901760
  %352 = vmatmul.mubr.f32.gmra.mxu0 %v351
  %v353 = vpop.f32.mrf.mxu0
  %v354 = vadd.f32 %v277, %v353
  %v355 = vpop.f32.mrf.mxu0
  %356 = vdwg.mxu0
  %357 = vmatprep.subr.mxu0 0.0
  %358 = vmatpush1.msra.mxu0 0.0
  %359 = vmatprep.subr.mxu0 0.0
  %360 = vmatpush1.msra.mxu0 0.0
  %361 = vmatprep.subr.mxu0 0.0
  %362 = vmatpush1.msra.mxu0 0.0
  %363 = vmatprep.subr.mxu0 0.0
  %364 = vmatpush1.msra.mxu0 0.0
  %365 = vmatprep.subr.mxu0 0.0
  %366 = vmatpush1.msra.mxu0 0.0
  %367 = vmatprep.subr.mxu0 0.0
  %368 = vmatpush1.msra.mxu0 0.0
  %369 = vmatprep.subr.mxu0 0.0
  %370 = vmatpush1.msra.mxu0 0.0
  %371 = vmatprep.subr.mxu0 0.0
  %372 = vmatpush1.msra.mxu0 0.0
  %373 = vmatprep.subr.mxu0 0.0
  %374 = vmatpush1.msra.mxu0 0.0
  %375 = vmatprep.subr.mxu0 0.0
  %376 = vmatpush1.msra.mxu0 0.0
  %377 = vmatprep.subr.mxu0 0.0
  %378 = vmatpush1.msra.mxu0 0.0
  %379 = vmatprep.subr.mxu0 0.0
  %380 = vmatpush1.msra.mxu0 0.0
  %381 = vmatprep.subr.mxu0 0.0
  %v382 = vand.u32 %v18, 4294901760
  %v383 = vsub.f32 %v18, %v382
  %v384 = vand.u32 %v383, 4294901760
  %385 = vmatpush1.msra.mxu0 %v384
  %386 = vmatprep.subr.mxu0 0.0
  %v387 = vand.u32 %v17, 4294901760
  %v388 = vsub.f32 %v17, %v387
  %v389 = vand.u32 %v388, 4294901760
  %390 = vmatpush1.msra.mxu0 %v389
  %391 = vmatprep.subr.mxu0 0.0
  %v392 = vand.u32 %v16, 4294901760
  %v393 = vsub.f32 %v16, %v392
  %v394 = vand.u32 %v393, 4294901760
  %395 = vmatpush1.msra.mxu0 %v394
  %396 = vmatprep.subr.mxu0 0.0
  %v397 = vand.u32 %v15, 4294901760
  %v398 = vsub.f32 %v15, %v397
  %v399 = vand.u32 %v398, 4294901760
  %400 = vmatpush1.msra.mxu0 %v399
  %401 = vmatprep.subr.mxu0 0.0
  %402 = vmatpush2.msra.mxu0 0.0
  %403 = vmatprep.subr.mxu0 0.0
  %404 = vmatpush2.msra.mxu0 0.0
  %405 = vmatprep.subr.mxu0 0.0
  %406 = vmatpush2.msra.mxu0 0.0
  %407 = vmatprep.subr.mxu0 0.0
  %408 = vmatpush2.msra.mxu0 0.0
  %409 = vmatprep.subr.mxu0 0.0
  %410 = vmatpush2.msra.mxu0 0.0
  %411 = vmatprep.subr.mxu0 0.0
  %412 = vmatpush2.msra.mxu0 0.0
  %413 = vmatprep.subr.mxu0 0.0
  %414 = vmatpush2.msra.mxu0 0.0
  %415 = vmatprep.subr.mxu0 0.0
  %416 = vmatpush2.msra.mxu0 0.0
  %417 = vmatprep.subr.mxu0 0.0
  %418 = vmatpush2.msra.mxu0 0.0
  %419 = vmatprep.subr.mxu0 0.0
  %420 = vmatpush2.msra.mxu0 0.0
  %421 = vmatprep.subr.mxu0 0.0
  %422 = vmatpush2.msra.mxu0 0.0
  %423 = vmatprep.subr.mxu0 0.0
  %424 = vmatpush2.msra.mxu0 0.0
  %425 = vmatprep.subr.mxu0 0.0
  %426 = vmatpush2.msra.mxu0 0.0
  %427 = vmatprep.subr.mxu0 0.0
  %428 = vmatpush2.msra.mxu0 0.0
  %429 = vmatprep.subr.mxu0 0.0
  %430 = vmatpush2.msra.mxu0 0.0
  %431 = vmatprep.subr.mxu0 0.0
  %432 = vmatpush2.msra.mxu0 0.0
  %433 = vmatprep.mubr.f32.mxu0 0.0
  %v434 = vand.u32 %v28, 4294901760
  %435 = vmatmul.mubr.f32.gmra.mxu0 %v434
  %v436 = vpop.f32.mrf.mxu0
  %v437 = vadd.f32 %v354, %v436
  %v438 = vpop.f32.mrf.mxu0
  %439 = vdwg.mxu0
  %440 = vmatprep.subr.mxu0 0.0
  %441 = vmatpush1.msra.mxu0 0.0
  %442 = vmatprep.subr.mxu0 0.0
  %443 = vmatpush1.msra.mxu0 0.0
  %444 = vmatprep.subr.mxu0 0.0
  %445 = vmatpush1.msra.mxu0 0.0
  %446 = vmatprep.subr.mxu0 0.0
  %447 = vmatpush1.msra.mxu0 0.0
  %448 = vmatprep.subr.mxu0 0.0
  %449 = vmatpush1.msra.mxu0 0.0
  %450 = vmatprep.subr.mxu0 0.0
  %451 = vmatpush1.msra.mxu0 0.0
  %452 = vmatprep.subr.mxu0 0.0
  %453 = vmatpush1.msra.mxu0 0.0
  %454 = vmatprep.subr.mxu0 0.0
  %455 = vmatpush1.msra.mxu0 0.0
  %456 = vmatprep.subr.mxu0 0.0
  %457 = vmatpush1.msra.mxu0 0.0
  %458 = vmatprep.subr.mxu0 0.0
  %459 = vmatpush1.msra.mxu0 0.0
  %460 = vmatprep.subr.mxu0 0.0
  %461 = vmatpush1.msra.mxu0 0.0
  %462 = vmatprep.subr.mxu0 0.0
  %463 = vmatpush1.msra.mxu0 0.0
  %464 = vmatprep.subr.mxu0 0.0
  %v465 = vand.u32 %v18, 4294901760
  %466 = vmatpush1.msra.mxu0 %v465
  %467 = vmatprep.subr.mxu0 0.0
  %v468 = vand.u32 %v17, 4294901760
  %469 = vmatpush1.msra.mxu0 %v468
  %470 = vmatprep.subr.mxu0 0.0
  %v471 = vand.u32 %v16, 4294901760
  %472 = vmatpush1.msra.mxu0 %v471
  %473 = vmatprep.subr.mxu0 0.0
  %v474 = vand.u32 %v15, 4294901760
  %475 = vmatpush1.msra.mxu0 %v474
  %476 = vmatprep.subr.mxu0 0.0
  %477 = vmatpush2.msra.mxu0 0.0
  %478 = vmatprep.subr.mxu0 0.0
  %479 = vmatpush2.msra.mxu0 0.0
  %480 = vmatprep.subr.mxu0 0.0
  %481 = vmatpush2.msra.mxu0 0.0
  %482 = vmatprep.subr.mxu0 0.0
  %483 = vmatpush2.msra.mxu0 0.0
  %484 = vmatprep.subr.mxu0 0.0
  %485 = vmatpush2.msra.mxu0 0.0
  %486 = vmatprep.subr.mxu0 0.0
  %487 = vmatpush2.msra.mxu0 0.0
  %488 = vmatprep.subr.mxu0 0.0
  %489 = vmatpush2.msra.mxu0 0.0
  %490 = vmatprep.subr.mxu0 0.0
  %491 = vmatpush2.msra.mxu0 0.0
  %492 = vmatprep.subr.mxu0 0.0
  %493 = vmatpush2.msra.mxu0 0.0
  %494 = vmatprep.subr.mxu0 0.0
  %495 = vmatpush2.msra.mxu0 0.0
  %496 = vmatprep.subr.mxu0 0.0
  %497 = vmatpush2.msra.mxu0 0.0
  %498 = vmatprep.subr.mxu0 0.0
  %499 = vmatpush2.msra.mxu0 0.0
  %500 = vmatprep.subr.mxu0 0.0
  %501 = vmatpush2.msra.mxu0 0.0
  %502 = vmatprep.subr.mxu0 0.0
  %503 = vmatpush2.msra.mxu0 0.0
  %504 = vmatprep.subr.mxu0 0.0
  %505 = vmatpush2.msra.mxu0 0.0
  %506 = vmatprep.subr.mxu0 0.0
  %507 = vmatpush2.msra.mxu0 0.0
  %508 = vmatprep.mubr.f32.mxu0 0.0
  %v509 = vand.u32 %v28, 4294901760
  %510 = vmatmul.mubr.f32.gmra.mxu0 %v509
  %v511 = vpop.f32.mrf.mxu0
  %v512 = vadd.f32 %v437, %v511
  %v513 = vpop.f32.mrf.mxu0
  %514 = vdwg.mxu0
  %516 = vrot.lane.b32.xlu0 %v512, 127
  %v517 = vpop.permute.xlu0 %516
  %v519 = vmax.f32 %v512, %v517
  %520 = vrot.lane.b32.xlu0 %v512, 126
  %v521 = vpop.permute.xlu0 %520
  %v523 = vmax.f32 %v519, %v521
  %525 = vset.pattern.permute.xlu0 0
  %526 = vperm.xlu0 %525, %v523
  %v527 = vpop.permute.xlu0 %526
  %v529 = vsub.f32 %v512, %v527
  %v530 = vmul.f32 %v529, 1.442695
  %v531 = vpow.pop %v530
  %533 = vrot.lane.b32.xlu0 %v531, 127
  %v534 = vpop.permute.xlu0 %533
  %v536 = vadd.f32 %v531, %v534
  %537 = vrot.lane.b32.xlu0 %v531, 126
  %v538 = vpop.permute.xlu0 %537
  %v540 = vadd.f32 %v536, %v538
  %542 = vset.pattern.permute.xlu0 0
  %543 = vperm.xlu0 %542, %v540
  %v544 = vpop.permute.xlu0 %543
  %v546 = vrcp.pop %v544
  %v547 = vmul.f32 %v531, %v546
  %vm548 = vcmask 23552
  %549 = vst.msk [vmem:[%s3] sm:$0xff] %vm548, %v547
  // Predicated region
  $region14: #{tpu_custom_call.1} parent=0 // pred_check
    _
  $region15: #{tpu_custom_call.1} parent=0 // pred_check_branch
    %551 = sbr.rel (0) target = $region17
  $region16: #{tpu_custom_call.1} parent=0 // pred_region
    _
  $region17: #{tpu_custom_call.1} parent=0 // pred_fallthru
    _
  // Predicated region
  $region18: #{tpu_custom_call.1} parent=0 // pred_check
    _
  $region19: #{tpu_custom_call.1} parent=0 // pred_check_branch
    %553 = sbr.rel (0) target = $region21
  $region20: #{tpu_custom_call.1} parent=0 // pred_region
    _
  $region21: #{tpu_custom_call.1} parent=0 // pred_fallthru
    _

</llo_original>
